<compile_context>
chip_gen: v5e
topology: v5e:2x2
jax: 0.10.0
libtpu: 0.0.40
codegen_flags: <defaults>
</compile_context>

<pallas_src>
import jax
import jax.numpy as jnp
from jax import lax
from jax.experimental import pallas as pl
from jax.experimental.pallas import tpu as pltpu

_LANES = 128                    # vreg lane width
_CHUNK_ROWS = 128               # target (Bb * rows) per in-kernel compute chunk
_TARGET_BLOCK_BYTES = 2 << 20   # ~2 MiB per input per grid step


def _round_up(x, m):
    return (x + m - 1) // m * m


def _cdiv(a, b):
    return (a + b - 1) // b


def _make_kernel(r_total):
    """r_total: number of valid feature rows (of 128 lanes) per batch row."""

    def kernel(pred_ref, tgt_ref, inter_ref, psum_ref, tsum_ref):
        # grid = (batch_blocks, feature_splits, feature_tiles); last = reduction.
        s = pl.program_id(1)
        j = pl.program_id(2)
        nj = pl.num_programs(2)

        @pl.when(j == 0)
        def _():
            inter_ref[...] = jnp.zeros_like(inter_ref)
            psum_ref[...] = jnp.zeros_like(psum_ref)
            tsum_ref[...] = jnp.zeros_like(tsum_ref)

        bb, tile_r, _ = pred_ref.shape

        # Rows of this tile that hold real data.  Everything past `valid`
        # (ragged last tile, or an empty tail tile of a feature split) is stale
        # VMEM from the clamped DMA and must be masked out.
        row0 = (s * nj + j) * tile_r
        valid = jnp.minimum(r_total - row0, tile_r)   # may be <= 0: fully masked

        sub = 16 if min(pred_ref.dtype.itemsize, tgt_ref.dtype.itemsize) < 4 else 8
        chunk = max(sub, (_CHUNK_ROWS // bb) // sub * sub)
        chunk = min(chunk, tile_r)
        n_full = tile_r // chunk
        rem = tile_r % chunk            # static, multiple of `sub`

        def accum(start, size, carry):
            i_acc, p_acc, t_acc = carry
            x = pred_ref[:, pl.ds(start, size), :].astype(jnp.float32)
            t = tgt_ref[:, pl.ds(start, size), :].astype(jnp.float32)
            rows = start + lax.broadcasted_iota(jnp.int32, (bb, size, _LANES), 1)
            m = rows < valid
            # sigmoid(x) == 0.5*tanh(0.5*x) + 0.5 : a single EUP transcendental.
            p = 0.5 * jnp.tanh(0.5 * x) + 0.5
            p = jnp.where(m, p, 0.0)
            t = jnp.where(m, t, 0.0)
            p4 = p.reshape(bb, size // 8, 8, _LANES)
            t4 = t.reshape(bb, size // 8, 8, _LANES)
            # Reduce only the leading chunk axis: pure vreg-wise VPU adds.
            i_acc = i_acc + jnp.sum(p4 * t4, axis=1, keepdims=True)
            p_acc = p_acc + jnp.sum(p4, axis=1, keepdims=True)
            t_acc = t_acc + jnp.sum(t4, axis=1, keepdims=True)
            return i_acc, p_acc, t_acc

        carry = (inter_ref[...], psum_ref[...], tsum_ref[...])

        def body(c, carry):
            start = pl.multiple_of(c * chunk, chunk)
            return accum(start, chunk, carry)

        carry = lax.fori_loop(0, n_full, body, carry)
        if rem:
            carry = accum(n_full * chunk, rem, carry)

        inter_ref[...], psum_ref[...], tsum_ref[...] = carry

    return kernel


def soft_iou_loss(pred, target):
    """pred, target: (N, C, H, W) float arrays. Returns scalar f32 loss."""
    smooth = 0.0
    N = pred.shape[0]
    F = 1
    for d in pred.shape[1:]:
        F *= d

    pred2 = pred.reshape(N, F)
    tgt2 = target.reshape(N, F)
    itemsize = max(pred2.dtype.itemsize, tgt2.dtype.itemsize)
    min_itemsize = min(pred2.dtype.itemsize, tgt2.dtype.itemsize)

    # Lane-dense view (N, R, 128).  Free bitcast reshape when F % 128 == 0.
    lane_rem = F % _LANES
    if lane_rem:
        # TODO(synk): rare fallback: pads only the last partial lane row, but
        # jnp.pad is still a full copy.  Common C*H*W shapes never take it.
        pad = _LANES - lane_rem
        pred2 = jnp.pad(pred2, ((0, 0), (0, pad)),
                        constant_values=-jnp.inf)     # sigmoid(-inf) == 0 exactly
        tgt2 = jnp.pad(tgt2, ((0, 0), (0, pad)), constant_values=0.0)
        F_lanes = F + pad
    else:
        F_lanes = F
    R = F_lanes // _LANES

    # 16-row alignment for packed sub-32-bit dtypes, 8 otherwise.
    row_align = 16 if min_itemsize < 4 else 8

    # Balanced feature tiles capped at ~2 MiB per input per grid step.
    max_tile_r = max(row_align,
                     (_TARGET_BLOCK_BYTES // (_LANES * itemsize))
                     // row_align * row_align)
    n_tiles = _cdiv(R, max_tile_r)
    tile_r = _round_up(_cdiv(R, n_tiles), row_align)
    num_tiles = _cdiv(R, tile_r)

    # Fold batch rows into one block when the per-row feature block is small
    # (amortizes the ~0.35 us per-grid-step overhead for tiny F).
    row_block_bytes = tile_r * _LANES * itemsize
    Bb = max(1, min(N, _TARGET_BLOCK_BYTES // row_block_bytes, 64))
    num_b = _cdiv(N, Bb)

    # Keep both v7x TensorCores fed when the batch grid collapses to one block:
    # split the feature tiles into two parallel halves (neutral on v5e/v6e).
    S = 2 if (num_b == 1 and num_tiles >= 2) else 1
    num_j = _cdiv(num_tiles, S)

    pred3 = pred2.reshape(N, R, _LANES)
    tgt3 = tgt2.reshape(N, R, _LANES)

    # Output first dim padded so every output block is full; sliced back below.
    N_pad = num_b * Bb
    acc_shape = jax.ShapeDtypeStruct((N_pad, S, 8, _LANES), jnp.float32)

    def in_index_map(b, s, j):
        # Clamp to a real tile; empty split-tail tiles are fully masked in-kernel.
        return (b, jnp.minimum(s * num_j + j, num_tiles - 1), 0)

    in_spec = pl.BlockSpec((Bb, tile_r, _LANES), in_index_map)
    out_spec = pl.BlockSpec((Bb, 1, 8, _LANES), lambda b, s, j: (b, s, 0, 0))

    cost = pl.CostEstimate(
        flops=int(8 * N * F),
        transcendentals=int(N * F),
        bytes_accessed=int(2 * N * F * itemsize + 3 * N_pad * S * 8 * _LANES * 4),
    )

    inter_acc, psum_acc, tsum_acc = pl.pallas_call(
        _make_kernel(R),
        out_shape=(acc_shape, acc_shape, acc_shape),
        grid_spec=pltpu.PrefetchScalarGridSpec(
            num_scalar_prefetch=0,
            grid=(num_b, S, num_j),
            in_specs=[in_spec, in_spec],
            out_specs=(out_spec, out_spec, out_spec),
        ),
        compiler_params=pltpu.CompilerParams(
            dimension_semantics=("parallel", "parallel", "arbitrary"),
            vmem_limit_bytes=32 * 1024 * 1024,
        ),
        cost_estimate=cost,
    )(pred3, tgt3)

    # Tiny wrapper-side finish: combine splits, final cross-lane reduction,
    # ratio and mean (negligible vs. the streaming pass in the kernel).
    inter = jnp.sum(inter_acc[:N], axis=(1, 2, 3))
    psum = jnp.sum(psum_acc[:N], axis=(1, 2, 3))
    tsum = jnp.sum(tsum_acc[:N], axis=(1, 2, 3))
    ratio = (inter + smooth) / (psum + tsum - inter + smooth)
    return 1.0 - jnp.mean(ratio)


def soft_iou_loss_ref(pred, target):
    p = jax.nn.sigmoid(pred.astype(jnp.float32))
    t = target.astype(jnp.float32)
    inter = jnp.sum(p * t, axis=(1, 2, 3))
    psum = jnp.sum(p, axis=(1, 2, 3))
    tsum = jnp.sum(t, axis=(1, 2, 3))
    return 1.0 - jnp.mean(inter / (psum + tsum - inter))


if __name__ == "__main__":
    key = jax.random.PRNGKey(0)
    k1, k2 = jax.random.split(key)
    N, C, H, W = 2, 4, 16, 16
    pred = jax.random.normal(k1, (N, C, H, W), dtype=jnp.float32)
    # target is a soft mask in [0, 1] (BCE-compatible in the original module)
    target = jax.random.uniform(k2, (N, C, H, W), dtype=jnp.float32)

    loss = jax.block_until_ready(soft_iou_loss(pred, target))
    ref = jax.block_until_ready(soft_iou_loss_ref(pred, target))

    assert jnp.allclose(loss, ref, atol=1e-5, rtol=1e-5), (loss, ref)
    print("KERNEL_OK")
</pallas_src>

<mosaic_0001>
module attributes {stable_mosaic.version = 11 : i64} {
  func.func @kernel(%arg0: i32, %arg1: i32, %arg2: i32, %arg3: memref<2x8x128xf32, #tpu.memory_space<vmem>>, %arg4: memref<2x8x128xf32, #tpu.memory_space<vmem>>, %arg5: memref<2x1x8x128xf32, #tpu.memory_space<vmem>>, %arg6: memref<2x1x8x128xf32, #tpu.memory_space<vmem>>, %arg7: memref<2x1x8x128xf32, #tpu.memory_space<vmem>>) attributes {dimension_semantics = [#tpu.dimension_semantics<parallel>, #tpu.dimension_semantics<parallel>, #tpu.dimension_semantics<arbitrary>], iteration_bounds = array<i64: 1, 1, 1>, scalar_prefetch = 0 : i64, scratch_operands = 0 : i64, tpu.core_type = #tpu.core_type<tc>, window_params = [{transform_indices = @transform_0, window_bounds = array<i64: 2, 8, 128>}, {transform_indices = @transform_1, window_bounds = array<i64: 2, 8, 128>}, {transform_indices = @transform_2, window_bounds = array<i64: 2, 1, 8, 128>}, {transform_indices = @transform_3, window_bounds = array<i64: 2, 1, 8, 128>}, {transform_indices = @transform_4, window_bounds = array<i64: 2, 1, 8, 128>}]} {
    %c0_i32 = arith.constant 0 : i32
    %0 = arith.cmpi eq, %arg2, %c0_i32 : i32
    %1 = arith.extui %0 : i1 to i32
    %c0_i32_0 = arith.constant 0 : i32
    %2 = arith.cmpi ne, %1, %c0_i32_0 : i32
    scf.if %2 {
      %cst_40 = arith.constant 0.000000e+00 : f32
      %48 = vector.broadcast %cst_40 : f32 to vector<2x1x8x128xf32>
      %c0_41 = arith.constant 0 : index
      %c0_42 = arith.constant 0 : index
      %c0_43 = arith.constant 0 : index
      %c0_44 = arith.constant 0 : index
      %49 = vector.load %arg5[%c0_41, %c0_42, %c0_43, %c0_44] : memref<2x1x8x128xf32, #tpu.memory_space<vmem>>, vector<2x1x8x128xf32>
      tpu.vector_store %arg5[%c0_41, %c0_42, %c0_43, %c0_44], %48 {strides = array<i32>} : memref<2x1x8x128xf32, #tpu.memory_space<vmem>>, vector<2x1x8x128xf32>,
      %cst_45 = arith.constant 0.000000e+00 : f32
      %50 = vector.broadcast %cst_45 : f32 to vector<2x1x8x128xf32>
      %c0_46 = arith.constant 0 : index
      %c0_47 = arith.constant 0 : index
      %c0_48 = arith.constant 0 : index
      %c0_49 = arith.constant 0 : index
      %51 = vector.load %arg6[%c0_46, %c0_47, %c0_48, %c0_49] : memref<2x1x8x128xf32, #tpu.memory_space<vmem>>, vector<2x1x8x128xf32>
      tpu.vector_store %arg6[%c0_46, %c0_47, %c0_48, %c0_49], %50 {strides = array<i32>} : memref<2x1x8x128xf32, #tpu.memory_space<vmem>>, vector<2x1x8x128xf32>,
      %cst_50 = arith.constant 0.000000e+00 : f32
      %52 = vector.broadcast %cst_50 : f32 to vector<2x1x8x128xf32>
      %c0_51 = arith.constant 0 : index
      %c0_52 = arith.constant 0 : index
      %c0_53 = arith.constant 0 : index
      %c0_54 = arith.constant 0 : index
      %53 = vector.load %arg7[%c0_51, %c0_52, %c0_53, %c0_54] : memref<2x1x8x128xf32, #tpu.memory_space<vmem>>, vector<2x1x8x128xf32>
      tpu.vector_store %arg7[%c0_51, %c0_52, %c0_53, %c0_54], %52 {strides = array<i32>} : memref<2x1x8x128xf32, #tpu.memory_space<vmem>>, vector<2x1x8x128xf32>,
    } else {
    }
    %c1_i32 = arith.constant 1 : i32
    %3 = arith.muli %arg1, %c1_i32 : i32
    %4 = arith.addi %3, %arg2 : i32
    %c8_i32 = arith.constant 8 : i32
    %5 = arith.muli %4, %c8_i32 : i32
    %c8_i32_1 = arith.constant 8 : i32
    %6 = arith.subi %c8_i32_1, %5 : i32
    %c8_i32_2 = arith.constant 8 : i32
    %7 = arith.minsi %6, %c8_i32_2 : i32
    %c0 = arith.constant 0 : index
    %c0_3 = arith.constant 0 : index
    %c0_4 = arith.constant 0 : index
    %c0_5 = arith.constant 0 : index
    %8 = vector.load %arg5[%c0, %c0_3, %c0_4, %c0_5] : memref<2x1x8x128xf32, #tpu.memory_space<vmem>>, vector<2x1x8x128xf32>
    %c0_6 = arith.constant 0 : index
    %c0_7 = arith.constant 0 : index
    %c0_8 = arith.constant 0 : index
    %c0_9 = arith.constant 0 : index
    %9 = vector.load %arg6[%c0_6, %c0_7, %c0_8, %c0_9] : memref<2x1x8x128xf32, #tpu.memory_space<vmem>>, vector<2x1x8x128xf32>
    %c0_10 = arith.constant 0 : index
    %c0_11 = arith.constant 0 : index
    %c0_12 = arith.constant 0 : index
    %c0_13 = arith.constant 0 : index
    %10 = vector.load %arg7[%c0_10, %c0_11, %c0_12, %c0_13] : memref<2x1x8x128xf32, #tpu.memory_space<vmem>>, vector<2x1x8x128xf32>
    %c0_i32_14 = arith.constant 0 : i32
    %c8_i32_15 = arith.constant 8 : i32
    %11 = arith.muli %c0_i32_14, %c8_i32_15 : i32
    %12 = tpu.assume_multiple %11, 8 : i32
    %c0_16 = arith.constant 0 : index
    %13 = arith.index_cast %12 : i32 to index
    %c0_17 = arith.constant 0 : index
    %14 = vector.load %arg3[%c0_16, %13, %c0_17] : memref<2x8x128xf32, #tpu.memory_space<vmem>>, vector<2x8x128xf32>
    %c0_18 = arith.constant 0 : index
    %15 = arith.index_cast %12 : i32 to index
    %c0_19 = arith.constant 0 : index
    %16 = vector.load %arg4[%c0_18, %15, %c0_19] : memref<2x8x128xf32, #tpu.memory_space<vmem>>, vector<2x8x128xf32>
    %17 = tpu.iota {dimensions = array<i32: 1>} : vector<2x8x128xi32>
    %18 = vector.broadcast %12 : i32 to vector<2x8x128xi32>
    %19 = arith.addi %18, %17 : vector<2x8x128xi32>
    %20 = vector.broadcast %7 : i32 to vector<2x8x128xi32>
    %21 = arith.cmpi slt, %19, %20 : vector<2x8x128xi32>
    %cst = arith.constant 5.000000e-01 : f32
    %22 = vector.broadcast %cst : f32 to vector<2x8x128xf32>
    %23 = arith.mulf %22, %14 : vector<2x8x128xf32>
    %24 = math.tanh %23 : vector<2x8x128xf32>
    %cst_20 = arith.constant 5.000000e-01 : f32
    %25 = vector.broadcast %cst_20 : f32 to vector<2x8x128xf32>
    %26 = arith.mulf %25, %24 : vector<2x8x128xf32>
    %cst_21 = arith.constant 5.000000e-01 : f32
    %27 = vector.broadcast %cst_21 : f32 to vector<2x8x128xf32>
    %28 = arith.addf %26, %27 : vector<2x8x128xf32>
    %cst_22 = arith.constant 0.000000e+00 : f32
    %29 = vector.broadcast %cst_22 : f32 to vector<2x8x128xf32>
    %30 = arith.select %21, %28, %29 : vector<2x8x128xi1>, vector<2x8x128xf32>
    %cst_23 = arith.constant 0.000000e+00 : f32
    %31 = vector.broadcast %cst_23 : f32 to vector<2x8x128xf32>
    %32 = arith.select %21, %16, %31 : vector<2x8x128xi1>, vector<2x8x128xf32>
    %33 = vector.shape_cast %30 : vector<2x8x128xf32> to vector<2x1x8x128xf32>
    %34 = vector.shape_cast %32 : vector<2x8x128xf32> to vector<2x1x8x128xf32>
    %35 = arith.mulf %33, %34 : vector<2x1x8x128xf32>
    %cst_24 = arith.constant dense<0.000000e+00> : vector<2x8x128xf32>
    %36 = vector.multi_reduction <add>, %35, %cst_24 [1] : vector<2x1x8x128xf32> to vector<2x8x128xf32>
    %37 = vector.shape_cast %36 : vector<2x8x128xf32> to vector<2x1x8x128xf32>
    %38 = arith.addf %8, %37 : vector<2x1x8x128xf32>
    %cst_25 = arith.constant dense<0.000000e+00> : vector<2x8x128xf32>
    %39 = vector.multi_reduction <add>, %33, %cst_25 [1] : vector<2x1x8x128xf32> to vector<2x8x128xf32>
    %40 = vector.shape_cast %39 : vector<2x8x128xf32> to vector<2x1x8x128xf32>
    %41 = arith.addf %9, %40 : vector<2x1x8x128xf32>
    %cst_26 = arith.constant dense<0.000000e+00> : vector<2x8x128xf32>
    %42 = vector.multi_reduction <add>, %34, %cst_26 [1] : vector<2x1x8x128xf32> to vector<2x8x128xf32>
    %43 = vector.shape_cast %42 : vector<2x8x128xf32> to vector<2x1x8x128xf32>
    %44 = arith.addf %10, %43 : vector<2x1x8x128xf32>
    %c1_i32_27 = arith.constant 1 : i32
    %c0_28 = arith.constant 0 : index
    %c0_29 = arith.constant 0 : index
    %c0_30 = arith.constant 0 : index
    %c0_31 = arith.constant 0 : index
    %45 = vector.load %arg5[%c0_28, %c0_29, %c0_30, %c0_31] : memref<2x1x8x128xf32, #tpu.memory_space<vmem>>, vector<2x1x8x128xf32>
    tpu.vector_store %arg5[%c0_28, %c0_29, %c0_30, %c0_31], %38 {strides = array<i32>} : memref<2x1x8x128xf32, #tpu.memory_space<vmem>>, vector<2x1x8x128xf32>,
    %c0_32 = arith.constant 0 : index
    %c0_33 = arith.constant 0 : index
    %c0_34 = arith.constant 0 : index
    %c0_35 = arith.constant 0 : index
    %46 = vector.load %arg6[%c0_32, %c0_33, %c0_34, %c0_35] : memref<2x1x8x128xf32, #tpu.memory_space<vmem>>, vector<2x1x8x128xf32>
    tpu.vector_store %arg6[%c0_32, %c0_33, %c0_34, %c0_35], %41 {strides = array<i32>} : memref<2x1x8x128xf32, #tpu.memory_space<vmem>>, vector<2x1x8x128xf32>,
    %c0_36 = arith.constant 0 : index
    %c0_37 = arith.constant 0 : index
    %c0_38 = arith.constant 0 : index
    %c0_39 = arith.constant 0 : index
    %47 = vector.load %arg7[%c0_36, %c0_37, %c0_38, %c0_39] : memref<2x1x8x128xf32, #tpu.memory_space<vmem>>, vector<2x1x8x128xf32>
    tpu.vector_store %arg7[%c0_36, %c0_37, %c0_38, %c0_39], %44 {strides = array<i32>} : memref<2x1x8x128xf32, #tpu.memory_space<vmem>>, vector<2x1x8x128xf32>,
    return
  }
  func.func @transform_0(%arg0: i32, %arg1: i32, %arg2: i32) -> (i32, i32, i32) {
    %c1_i32 = arith.constant 1 : i32
    %0 = arith.muli %arg1, %c1_i32 : i32
    %1 = arith.addi %0, %arg2 : i32
    %c0_i32 = arith.constant 0 : i32
    %2 = arith.minsi %1, %c0_i32 : i32
    %c0_i32_0 = arith.constant 0 : i32
    %c0_i32_1 = arith.constant 0 : i32
    return %arg0, %2, %c0_i32_0 : i32, i32, i32
  }
  func.func @transform_1(%arg0: i32, %arg1: i32, %arg2: i32) -> (i32, i32, i32) {
    %c1_i32 = arith.constant 1 : i32
    %0 = arith.muli %arg1, %c1_i32 : i32
    %1 = arith.addi %0, %arg2 : i32
    %c0_i32 = arith.constant 0 : i32
    %2 = arith.minsi %1, %c0_i32 : i32
    %c0_i32_0 = arith.constant 0 : i32
    %c0_i32_1 = arith.constant 0 : i32
    return %arg0, %2, %c0_i32_0 : i32, i32, i32
  }
  func.func @transform_2(%arg0: i32, %arg1: i32, %arg2: i32) -> (i32, i32, i32, i32) {
    %c0_i32 = arith.constant 0 : i32
    %c0_i32_0 = arith.constant 0 : i32
    %c0_i32_1 = arith.constant 0 : i32
    return %arg0, %arg1, %c0_i32, %c0_i32_0 : i32, i32, i32, i32
  }
  func.func @transform_3(%arg0: i32, %arg1: i32, %arg2: i32) -> (i32, i32, i32, i32) {
    %c0_i32 = arith.constant 0 : i32
    %c0_i32_0 = arith.constant 0 : i32
    %c0_i32_1 = arith.constant 0 : i32
    return %arg0, %arg1, %c0_i32, %c0_i32_0 : i32, i32, i32, i32
  }
  func.func @transform_4(%arg0: i32, %arg1: i32, %arg2: i32) -> (i32, i32, i32, i32) {
    %c0_i32 = arith.constant 0 : i32
    %c0_i32_0 = arith.constant 0 : i32
    %c0_i32_1 = arith.constant 0 : i32
    return %arg0, %arg1, %c0_i32, %c0_i32_0 : i32, i32, i32, i32
  }
}

</mosaic_0001>

<llo_original>
// kernel: tpu_custom_call.1
$region0: #{tpu_custom_call.1}
  #allocation0 [shape = 'u32[]', space=smem, size = 0x4, offset = 0x4, fixed_abs, tag = 'smem constant byte address 0x4 - core index']
  #allocation1 [shape = 'u32[72,128]{1,0:T(1,128)}', space=vmem, size = 0x9000, scoped, tag = 'internal scratch']
  %s0 = inlined_call_operand.hbm [shape: f32[2,8,128], index: 0, kind: input, shape index: {}]
  %s1 = inlined_call_operand.hbm [shape: f32[2,8,128], index: 1, kind: input, shape index: {}]
  %s2 = inlined_call_operand.hbm [shape: f32[2,1,8,128], index: 2, kind: output, shape index: {0}]
  %s3 = inlined_call_operand.hbm [shape: f32[2,1,8,128], index: 3, kind: output, shape index: {1}]
  %s4 = inlined_call_operand.hbm [shape: f32[2,1,8,128], index: 4, kind: output, shape index: {2}]
  %5 = xla_tuple %s2, %s3, %s4
  %s6 = sld [smem:[#allocation0]]
  $region46: #{tpu_custom_call.1} parent=0
    _
  %s8 = ssub.s32 1, %s6
  %s9 = scalar_select 0, %s8, %s6
  $region1: #{tpu_custom_call.1} parent=0
    #allocation2 [shape = 'u8[8192]{0}', space=vmem, size = 0x2000, scoped, tag = 'input window, operand 0, single buffered']
    #allocation3 [shape = 's32[1]{0}', space=sflag, size = 0x4, scoped, tag = 'scoped memory for tpu_custom_call.1']
    #allocation4 [shape = 's32[1]{0}', space=sflag, size = 0x4, scoped, tag = 'scoped memory for tpu_custom_call.1']
    #allocation5 [shape = 'u8[8192]{0}', space=vmem, size = 0x2000, scoped, tag = 'input window, operand 1, single buffered']
    #allocation6 [shape = 's32[1]{0}', space=sflag, size = 0x4, scoped, tag = 'scoped memory for tpu_custom_call.1']
    #allocation7 [shape = 'u8[8192]{0}', space=vmem, size = 0x2000, scoped, tag = 'output window, operand 0, single buffered']
    #allocation8 [shape = 'u8[8192]{0}', space=vmem, size = 0x2000, scoped, tag = 'output window, operand 1, single buffered']
    #allocation9 [shape = 's32[1]{0}', space=sflag, size = 0x4, scoped, tag = 'scoped memory for tpu_custom_call.1']
    #allocation10 [shape = 'u8[8192]{0}', space=vmem, size = 0x2000, scoped, tag = 'output window, operand 2, single buffered']
    %10 = vsyncpa [#allocation3], 0
    %11 = vsyncpa [#allocation6], 0
    %12 = vsyncpa [#allocation4], 0
    %13 = vsyncpa [#allocation9], 0
    // Predicated region
    $region2: #{tpu_custom_call.1} parent=1 // pred_check
      _
    $region3: #{tpu_custom_call.1} parent=1 // pred_check_branch
      %15 = sbr.rel (0) target = $region5
    $region4: #{tpu_custom_call.1} parent=1 // pred_region
      %s16 = sadd.s32 0, 0
      %p17 = scmp.lt.s32.totalorder %s16, 0
      %s18 = scalar_select %p17, %s16, 0
      %20 = vsyncadd [#allocation3], 0
      %s21 = smul.addr %s18, 8
      %s22 = scalar_lea.hbm %s0, %s21
      %s23 = sshll.u32 %s22, 4
      %s24 = int_to_ptr.hbm [resolvable:$true] %s23
      %s25 = sshll.u32 [#allocation2], 4
      %s26 = int_to_ptr.vmem [resolvable:$true] %s25
      %31 = dma.hbm_to_vmem [thread:$0]  %s24, 256, %s26, [#allocation3], 128, 128, 8
    $region5: #{tpu_custom_call.1} parent=1 // pred_fallthru
      _
    // Predicated region
    $region6: #{tpu_custom_call.1} parent=1 // pred_check
      _
    $region7: #{tpu_custom_call.1} parent=1 // pred_check_branch
      %33 = sbr.rel (0) target = $region9
    $region8: #{tpu_custom_call.1} parent=1 // pred_region
      %s34 = sadd.s32 0, 0
      %p35 = scmp.lt.s32.totalorder %s34, 0
      %s36 = scalar_select %p35, %s34, 0
      %38 = vsyncadd [#allocation6], 0
      %s39 = smul.addr %s36, 8
      %s40 = scalar_lea.hbm %s1, %s39
      %s41 = sshll.u32 %s40, 4
      %s42 = int_to_ptr.hbm [resolvable:$true] %s41
      %s43 = sshll.u32 [#allocation5], 4
      %s44 = int_to_ptr.vmem [resolvable:$true] %s43
      %49 = dma.hbm_to_vmem [thread:$0]  %s42, 256, %s44, [#allocation6], 128, 128, 8
    $region9: #{tpu_custom_call.1} parent=1 // pred_fallthru
      _
    // Predicated region
    $region10: #{tpu_custom_call.1} parent=1 // pred_check
      _
    $region11: #{tpu_custom_call.1} parent=1 // pred_check_branch
      %51 = sbr.rel (0) target = $region13
    $region12: #{tpu_custom_call.1} parent=1 // pred_region
      %53 = dma.done [#allocation3], 256
    $region13: #{tpu_custom_call.1} parent=1 // pred_fallthru
      _
    // Predicated region
    $region14: #{tpu_custom_call.1} parent=1 // pred_check
      _
    $region15: #{tpu_custom_call.1} parent=1 // pred_check_branch
      %55 = sbr.rel (0) target = $region17
    $region16: #{tpu_custom_call.1} parent=1 // pred_region
      %57 = dma.done [#allocation6], 256
    $region17: #{tpu_custom_call.1} parent=1 // pred_fallthru
      _
    %s58 = sadd.s32 0, 0
    %p59 = scmp.lt.s32.totalorder %s58, 0
    %s60 = scalar_select %p59, %s58, 0
    %s61 = sadd.s32 0, 0
    %p62 = scmp.lt.s32.totalorder %s61, 0
    %s63 = scalar_select %p62, %s61, 0
    %p64 = scmp.eq.s32.totalorder 0, 0
    // Predicated region
    $region18: #{tpu_custom_call.1} parent=1 // pred_check
      %p65 = pneg %p64
    $region19: #{tpu_custom_call.1} parent=1 // pred_check_branch
      %67 = sbr.rel (%p65) target = $region21
    $region20: #{tpu_custom_call.1} parent=1 // pred_region
      %68 = vst [vmem:[#allocation7] sm:$0xff] 0.0
      %69 = vst [vmem:[#allocation7 + $0x8] sm:$0xff] 0.0
      %70 = vst [vmem:[#allocation8] sm:$0xff] 0.0
      %71 = vst [vmem:[#allocation8 + $0x8] sm:$0xff] 0.0
      %72 = vst [vmem:[#allocation10] sm:$0xff] 0.0
      %73 = vst [vmem:[#allocation10 + $0x8] sm:$0xff] 0.0
    $region21: #{tpu_custom_call.1} parent=1 // pred_fallthru
      _
    %s74 = sadd.s32 0, 0
    %s75 = smul.u32 %s74, 8
    %s76 = ssub.s32 8, %s75
    %p77 = scmp.lt.s32.totalorder %s76, 8
    %s78 = scalar_select %p77, %s76, 8
    %v79 = vld [vmem:[#allocation7] sm:$0xff]
    %v80 = vld [vmem:[#allocation7 + $0x8] sm:$0xff]
    %v81 = vld [vmem:[#allocation8] sm:$0xff]
    %v82 = vld [vmem:[#allocation8 + $0x8] sm:$0xff]
    %v83 = vld [vmem:[#allocation10] sm:$0xff]
    %v84 = vld [vmem:[#allocation10 + $0x8] sm:$0xff]
    %v85 = vld [vmem:[#allocation2] sm:$0xff]
    %v86 = vld [vmem:[#allocation2 + $0x8] sm:$0xff]
    %v87 = vld [vmem:[#allocation5] sm:$0xff]
    %v88 = vld [vmem:[#allocation5 + $0x8] sm:$0xff]
    %v89 = vlaneseq
    %v90 = vshrl.u32 %v89, 7
    %v91 = vstv 0
    %v92 = vadd.s32 %v91, %v90
    %v93 = vstv %s78
    %vm94 = vcmp.lt.s32.totalorder %v92, %v93
    %v95 = vmul.f32 %v85, 0.5
    %v96 = vmul.f32 %v86, 0.5
    %v97 = vtanh.pop %v95
    %v98 = vtanh.pop %v96
    %v99 = vmul.f32 %v97, 0.5
    %v100 = vmul.f32 %v98, 0.5
    %v101 = vadd.f32 %v99, 0.5
    %v102 = vadd.f32 %v100, 0.5
    %v103 = vsel %vm94, %v101, 0.0
    %v104 = vsel %vm94, %v102, 0.0
    %v105 = vsel %vm94, %v87, 0.0
    %v106 = vsel %vm94, %v88, 0.0
    %v107 = vmul.f32 %v103, %v105
    %v108 = vmul.f32 %v104, %v106
    %v109 = vadd.f32 %v107, 0.0
    %v110 = vadd.f32 %v108, 0.0
    %v111 = vadd.f32 %v79, %v109
    %v112 = vadd.f32 %v80, %v110
    %v113 = vadd.f32 %v103, 0.0
    %v114 = vadd.f32 %v104, 0.0
    %v115 = vadd.f32 %v81, %v113
    %v116 = vadd.f32 %v82, %v114
    %v117 = vadd.f32 %v105, 0.0
    %v118 = vadd.f32 %v106, 0.0
    %v119 = vadd.f32 %v83, %v117
    %v120 = vadd.f32 %v84, %v118
    %121 = vst [vmem:[#allocation7] sm:$0xff] %v111
    %122 = vst [vmem:[#allocation7 + $0x8] sm:$0xff] %v112
    %123 = vst [vmem:[#allocation8] sm:$0xff] %v115
    %124 = vst [vmem:[#allocation8 + $0x8] sm:$0xff] %v116
    %125 = vst [vmem:[#allocation10] sm:$0xff] %v119
    %126 = vst [vmem:[#allocation10 + $0x8] sm:$0xff] %v120
    // Predicated region
    $region22: #{tpu_custom_call.1} parent=1 // pred_check
      _
    $region23: #{tpu_custom_call.1} parent=1 // pred_check_branch
      %128 = sbr.rel (0) target = $region25
    $region24: #{tpu_custom_call.1} parent=1 // pred_region
      %130 = vsyncadd [#allocation4], 0
      %s131 = sshll.u32 [#allocation7], 4
      %s132 = int_to_ptr.vmem [resolvable:$true] %s131
      %s133 = sshll.u32 %s2, 4
      %s134 = int_to_ptr.hbm [resolvable:$true] %s133
      %139 = dma.vmem_to_hbm [thread:$0]  %s132, 256, %s134, [#allocation4], 128, 128, 8
    $region25: #{tpu_custom_call.1} parent=1 // pred_fallthru
      _
    // Predicated region
    $region26: #{tpu_custom_call.1} parent=1 // pred_check
      _
    $region27: #{tpu_custom_call.1} parent=1 // pred_check_branch
      %141 = sbr.rel (0) target = $region29
    $region28: #{tpu_custom_call.1} parent=1 // pred_region
      %143 = vsyncadd [#allocation9], 0
      %s144 = sshll.u32 [#allocation8], 4
      %s145 = int_to_ptr.vmem [resolvable:$true] %s144
      %s146 = sshll.u32 %s3, 4
      %s147 = int_to_ptr.hbm [resolvable:$true] %s146
      %152 = dma.vmem_to_hbm [thread:$0]  %s145, 256, %s147, [#allocation9], 128, 128, 8
    $region29: #{tpu_custom_call.1} parent=1 // pred_fallthru
      _
    // Predicated region
    $region30: #{tpu_custom_call.1} parent=1 // pred_check
      _
    $region31: #{tpu_custom_call.1} parent=1 // pred_check_branch
      %154 = sbr.rel (0) target = $region33
    $region32: #{tpu_custom_call.1} parent=1 // pred_region
      %156 = vsyncadd [#allocation9], 0
      %s157 = sshll.u32 [#allocation10], 4
      %s158 = int_to_ptr.vmem [resolvable:$true] %s157
      %s159 = sshll.u32 %s4, 4
      %s160 = int_to_ptr.hbm [resolvable:$true] %s159
      %165 = dma.vmem_to_hbm [thread:$0]  %s158, 256, %s160, [#allocation9], 128, 128, 8
    $region33: #{tpu_custom_call.1} parent=1 // pred_fallthru
      _
    // Predicated region
    $region34: #{tpu_custom_call.1} parent=1 // pred_check
      _
    $region35: #{tpu_custom_call.1} parent=1 // pred_check_branch
      %167 = sbr.rel (0) target = $region37
    $region36: #{tpu_custom_call.1} parent=1 // pred_region
      %169 = dma.done [#allocation4], 256
    $region37: #{tpu_custom_call.1} parent=1 // pred_fallthru
      _
    // Predicated region
    $region38: #{tpu_custom_call.1} parent=1 // pred_check
      _
    $region39: #{tpu_custom_call.1} parent=1 // pred_check_branch
      %171 = sbr.rel (0) target = $region41
    $region40: #{tpu_custom_call.1} parent=1 // pred_region
      %173 = dma.done [#allocation9], 256
    $region41: #{tpu_custom_call.1} parent=1 // pred_fallthru
      _
    // Predicated region
    $region42: #{tpu_custom_call.1} parent=1 // pred_check
      _
    $region43: #{tpu_custom_call.1} parent=1 // pred_check_branch
      %175 = sbr.rel (0) target = $region45
    $region44: #{tpu_custom_call.1} parent=1 // pred_region
      %177 = dma.done [#allocation9], 256
    $region45: #{tpu_custom_call.1} parent=1 // pred_fallthru
      _
    %178 = vsyncpa [#allocation3], 1
    %179 = vsyncpa [#allocation6], 1
    %180 = vsyncpa [#allocation4], 1
    %181 = vsyncpa [#allocation9], 1

</llo_original>
